<compile_context>
chip_gen: v5e
topology: v5e:2x2
jax: 0.10.0
libtpu: 0.0.40
codegen_flags: <defaults>
</compile_context>

<pallas_src>
import functools
import math

import jax
import jax.numpy as jnp
from jax import lax
from jax.experimental import pallas as pl
from jax.experimental.pallas import tpu as pltpu

_HIGHEST = jax.lax.Precision.HIGHEST


# ---------------------------------------------------------------------------
# Kernel 1: single ALIF step (literal ALIFCell.forward)
# ---------------------------------------------------------------------------
def _alif_step_kernel(xh_ref, cx_ref, cb_ref, w_ref, b_ref, tm_ref, ta_ref,
                      hy_ref, cy_ref, cb_out_ref, *, threshold):
    # one fused MXU matmul:  [x | hx] @ [W_ih^T ; W_hh^T]  (+ bias)
    cur = jnp.dot(xh_ref[...], w_ref[...],
                  preferred_element_type=jnp.float32) + b_ref[...]
    tau_m = tm_ref[...]          # sigmoid(tau_m)   [1, H] -> broadcasts over batch
    tau_adp = ta_ref[...]        # sigmoid(tau_adp)
    cy = tau_m * cx_ref[...] + (1.0 - tau_m) * cur
    hy = (cy >= threshold).astype(jnp.float32)            # Triangle.forward
    cb = tau_adp * cb_ref[...] + (1.0 - tau_adp) * hy
    cy = cy - hy * cb
    hy_ref[...] = hy
    cy_ref[...] = cy
    cb_out_ref[...] = cb


def alif_step_pallas(xh, cx, cb, w_fused_t, bias, tau_m_sig, tau_adp_sig, threshold):
    """xh: [B, D+H] = concat(x, hx); w_fused_t: [D+H, H] pre-transposed fused weight.

    NOTE: prefer alif_sequence_pallas for sequences; this per-step call is dominated
    by launch/DMA overhead at small B.
    """
    B, H = cx.shape
    kernel = functools.partial(_alif_step_kernel, threshold=float(threshold))
    return pl.pallas_call(
        kernel,
        out_shape=(
            jax.ShapeDtypeStruct((B, H), jnp.float32),
            jax.ShapeDtypeStruct((B, H), jnp.float32),
            jax.ShapeDtypeStruct((B, H), jnp.float32),
        ),
    )(xh, cx, cb, w_fused_t, bias, tau_m_sig, tau_adp_sig)


# ---------------------------------------------------------------------------
# Kernel 2: ALIF cell applied over a whole [T, B, D] sequence
#           grid = (batch_tiles ["parallel"], time_chunks ["arbitrary"])
# ---------------------------------------------------------------------------
def _alif_seq_kernel(x_ref, h0_ref, c0_ref, b0_ref, wih_ref, whh_ref, bias_ref,
                     tm_ref, ta_ref,
                     hy_ref, hT_ref, cT_ref, bT_ref,
                     xp_ref,
                     *, threshold, time_chunk, total_steps, needs_mask, unroll):
    ti = pl.program_id(1)        # time-chunk index (sequential / "arbitrary")

    # Carried state lives in the resident final-state output blocks (index_map constant
    # over the time axis). Initialize once per batch tile.
    @pl.when(ti == 0)
    def _():
        hT_ref[...] = h0_ref[...]
        cT_ref[...] = c0_ref[...]
        bT_ref[...] = b0_ref[...]

    bb, H = h0_ref.shape
    D = x_ref.shape[-1]

    # ---- input projection for the whole chunk: ONE lane-dense MXU matmul --------------
    # (folded in-kernel: no xp HBM round-trip; only the recurrent h @ W_hh^T stays in
    #  the serial time loop)
    wih = wih_ref[...]                                    # [D, H]
    whh = whh_ref[...]                                    # [H, H]
    lhs = x_ref[...].reshape(time_chunk * bb, D)
    if lhs.dtype != wih.dtype:
        lhs = lhs.astype(wih.dtype)                       # (optional bf16 matmul path)
    xp = jnp.dot(lhs, wih, preferred_element_type=jnp.float32) + bias_ref[...]
    xp_ref[...] = xp.reshape(time_chunk, bb, H)

    # ---- loop-invariant broadcasts hoisted (JAX does not CSE broadcast_in_dim) --------
    tau_m = pl.broadcast_to(tm_ref[...], (bb, H))
    one_m_tau_m = pl.broadcast_to(1.0 - tm_ref[...], (bb, H))
    tau_adp = pl.broadcast_to(ta_ref[...], (bb, H))
    one_m_tau_adp = pl.broadcast_to(1.0 - ta_ref[...], (bb, H))

    base = ti * time_chunk                                # global timestep of step t=0

    def step(t, carry):
        h, c, b = carry
        h_mm = h if h.dtype == whh.dtype else h.astype(whh.dtype)  # spikes exact in bf16
        cur = xp_ref[t] + jnp.dot(h_mm, whh, preferred_element_type=jnp.float32)
        cy = tau_m * c + one_m_tau_m * cur
        hy = (cy >= threshold).astype(jnp.float32)        # Triangle.forward spike
        nb = tau_adp * b + one_m_tau_adp * hy
        ncy = cy - hy * nb
        hy_ref[t] = hy.astype(hy_ref.dtype)
        if needs_mask:
            # Padded tail chunk: freeze the carried state on steps >= total_steps so the
            # returned final state is exactly the state after T real steps.
            valid = ((base + t) < total_steps).astype(jnp.float32)
            inval = 1.0 - valid
            h = valid * hy + inval * h
            c = valid * ncy + inval * c
            b = valid * nb + inval * b
        else:
            h, c, b = hy, ncy, nb
        return h, c, b

    h, c, b = lax.fori_loop(0, time_chunk, step,
                            (hT_ref[...], cT_ref[...], bT_ref[...]),
                            unroll=unroll)

    hT_ref[...] = h
    cT_ref[...] = c
    bT_ref[...] = b


def alif_sequence_pallas(params, x_seq, state, *, threshold=1.0, time_chunk=64,
                         batch_block=None, spike_dtype=jnp.float32,
                         matmul_dtype=jnp.float32, unroll=8):
    """Apply the ALIF cell over a time-major [T, B, D] sequence.

    Returns (hy_seq [T, B, H] in `spike_dtype`, (hy_T, cy_T, cb_T)) — identical to
    looping ALIFCell.forward over t with state threading.

    Perf notes:
      * stack independent sequences / sub-bands along B (the MXU M dimension) — the
        recurrence is a serial chain, so B is the only free throughput axis;
      * `batch_block` adds a leading "parallel" grid axis (2nd TensorCore on v7x);
      * `spike_dtype=jnp.bfloat16` is exact for 0/1 spikes and halves the hy writeback
        (use batch_block that is a multiple of 16 or the full B);
      * `matmul_dtype=jnp.bfloat16` trades exact spike equality for 3-6x MXU throughput.
    """
    T, B, D = x_seq.shape
    H = params["weight_hh"].shape[0]

    if len(state) == 2:
        hx, cx = state
        cb = jnp.ones_like(hx)
    else:
        hx, cx, cb = state

    f32 = jnp.float32
    # ---- hoisted, per-call-constant prep (pre-transpose / sigmoid; never in-kernel) ---
    w_ih_t = params["weight_ih"].T.astype(matmul_dtype)          # [D, H]
    w_hh_t = params["weight_hh"].T.astype(matmul_dtype)          # [H, H]
    bias = params["bias_ih"].reshape(1, H).astype(f32)
    tau_m_sig = jax.nn.sigmoid(params["tau_m"].astype(f32)).reshape(1, H)
    tau_adp_sig = jax.nn.sigmoid(params["tau_adp"].astype(f32)).reshape(1, H)

    # ---- time chunking: pad T up to a multiple of tc (masked tail keeps state exact) --
    tc = int(min(time_chunk, T))
    n_chunks = -(-T // tc)                                       # ceil
    T_pad = n_chunks * tc
    needs_mask = (T_pad != T)

    x = x_seq.astype(f32)
    if needs_mask:
        x = jnp.pad(x, ((0, T_pad - T), (0, 0), (0, 0)))

    # ---- batch tiling (leading "parallel" grid axis) -----------------------------------
    if batch_block is None or batch_block <= 0 or B % batch_block != 0:
        bb = B
    else:
        bb = int(batch_block)
    n_btiles = B // bb

    unroll_n = int(max(1, min(unroll, tc)))

    kernel = functools.partial(
        _alif_seq_kernel, threshold=float(threshold), time_chunk=tc,
        total_steps=T, needs_mask=needs_mask, unroll=unroll_n)

    grid_spec = pltpu.PrefetchScalarGridSpec(
        num_scalar_prefetch=0,
        grid=(n_btiles, n_chunks),
        in_specs=[
            pl.BlockSpec((tc, bb, D), lambda bi, ti: (ti, bi, 0)),   # raw x chunk
            pl.BlockSpec((bb, H), lambda bi, ti: (bi, 0)),           # hx0
            pl.BlockSpec((bb, H), lambda bi, ti: (bi, 0)),           # cx0
            pl.BlockSpec((bb, H), lambda bi, ti: (bi, 0)),           # cb0
            pl.BlockSpec((D, H), lambda bi, ti: (0, 0)),             # W_ih^T
            pl.BlockSpec((H, H), lambda bi, ti: (0, 0)),             # W_hh^T (loop-invariant)
            pl.BlockSpec((1, H), lambda bi, ti: (0, 0)),             # bias
            pl.BlockSpec((1, H), lambda bi, ti: (0, 0)),             # sigmoid(tau_m)
            pl.BlockSpec((1, H), lambda bi, ti: (0, 0)),             # sigmoid(tau_adp)
        ],
        out_specs=[
            pl.BlockSpec((tc, bb, H), lambda bi, ti: (ti, bi, 0)),   # spike train
            pl.BlockSpec((bb, H), lambda bi, ti: (bi, 0)),           # final hy (resident)
            pl.BlockSpec((bb, H), lambda bi, ti: (bi, 0)),           # final cy (resident)
            pl.BlockSpec((bb, H), lambda bi, ti: (bi, 0)),           # final cb (resident)
        ],
        scratch_shapes=[pltpu.VMEM((tc, bb, H), jnp.float32)],       # per-chunk x-projection
    )

    spike_bytes = jnp.dtype(spike_dtype).itemsize
    w_bytes = jnp.dtype(matmul_dtype).itemsize
    cost = pl.CostEstimate(
        flops=int(2 * T * B * H * (H + D)),
        transcendentals=0,
        bytes_accessed=int(T_pad * B * D * 4 + T_pad * B * H * spike_bytes
                           + (D + H) * H * w_bytes + 7 * B * H * 4),
    )

    hy_seq, hT, cT, bT = pl.pallas_call(
        kernel,
        out_shape=(
            jax.ShapeDtypeStruct((T_pad, B, H), spike_dtype),
            jax.ShapeDtypeStruct((B, H), f32),
            jax.ShapeDtypeStruct((B, H), f32),
            jax.ShapeDtypeStruct((B, H), f32),
        ),
        grid_spec=grid_spec,
        compiler_params=pltpu.CompilerParams(
            dimension_semantics=("parallel", "arbitrary"),  # batch tiles parallel, time serial
        ),
        cost_estimate=cost,
    )(x, hx.astype(f32), cx.astype(f32), cb.astype(f32),
      w_ih_t, w_hh_t, bias, tau_m_sig, tau_adp_sig)

    if needs_mask:
        hy_seq = hy_seq[:T]
    return hy_seq, (hT, cT, bT)


# ---------------------------------------------------------------------------
# ALIFCell module (JAX/Pallas port of the PyTorch class, forward pass only)
# ---------------------------------------------------------------------------
class ALIFCell:
    def __init__(self, input_size, hidden_size, bn=False, threshold=1.0, *, key):
        self.input_size = input_size
        self.hidden_size = hidden_size
        self.use_bn = bn                 # stored but unused in forward, like the PyTorch module
        self.threshold = float(threshold)

        stdv = 1.0 / math.sqrt(hidden_size) if hidden_size > 0 else 0.0
        k_ih, k_hh, k_b = jax.random.split(key, 3)
        weight_ih = jax.random.uniform(k_ih, (hidden_size, input_size), jnp.float32, -stdv, stdv)
        weight_hh = jax.random.uniform(k_hh, (hidden_size, hidden_size), jnp.float32, -stdv, stdv)
        bias_ih = jax.random.uniform(k_b, (hidden_size,), jnp.float32, -stdv, stdv)
        # tau_m / tau_adp are created AFTER reset_parameters() in the PyTorch module,
        # so they keep their constructor values.
        tau_m = jnp.zeros((hidden_size,), jnp.float32)
        tau_adp = jnp.ones((hidden_size,), jnp.float32) * -1.3

        self.params = dict(weight_ih=weight_ih, weight_hh=weight_hh, bias_ih=bias_ih,
                           tau_m=tau_m, tau_adp=tau_adp)

        # Hoisted, pre-transposed / fused kernel operands (computed once, not per step).
        self.w_fused_t = jnp.concatenate([weight_ih.T, weight_hh.T], axis=0)  # [D+H, H]
        self.bias_row = bias_ih.reshape(1, hidden_size)
        self.tau_m_sig = jax.nn.sigmoid(tau_m).reshape(1, hidden_size)
        self.tau_adp_sig = jax.nn.sigmoid(tau_adp).reshape(1, hidden_size)

    def forward(self, input, state):
        if len(state) == 2:
            hx, cx = state
            cb = jnp.ones_like(hx)
        elif len(state) == 3:
            hx, cx, cb = state
        else:
            raise ValueError("state must have 2 or 3 entries")
        xh = jnp.concatenate([input, hx], axis=-1).astype(jnp.float32)
        hy, cy, cb = alif_step_pallas(
            xh, cx.astype(jnp.float32), cb.astype(jnp.float32),
            self.w_fused_t, self.bias_row, self.tau_m_sig, self.tau_adp_sig,
            self.threshold)
        return hy, (hy, cy, cb)


# ---------------------------------------------------------------------------
# Pure-JAX reference (mirrors the PyTorch forward exactly) for verification
# ---------------------------------------------------------------------------
def alif_step_ref(params, threshold, x, state):
    if len(state) == 2:
        hx, cx = state
        cb = jnp.ones_like(hx)
    else:
        hx, cx, cb = state
    cur = (jnp.dot(x, params["weight_ih"].T, precision=_HIGHEST)
           + params["bias_ih"]
           + jnp.dot(hx, params["weight_hh"].T, precision=_HIGHEST))
    tau_m = jax.nn.sigmoid(params["tau_m"])
    tau_adp = jax.nn.sigmoid(params["tau_adp"])
    cy = tau_m * cx + (1.0 - tau_m) * cur
    hy = (cy - threshold >= 0.0).astype(cy.dtype)        # Triangle.forward
    cb = tau_adp * cb + (1.0 - tau_adp) * hy
    cy = cy - hy * cb
    return hy, (hy, cy, cb)


# ---------------------------------------------------------------------------
if __name__ == "__main__":
    T, B = 40, 32                 # T NOT a multiple of time_chunk -> exercises the masked tail
    INPUT_SIZE, HIDDEN = 32, 128  # H multiple of 128 (lanes), B multiple of 8 (sublanes)
    THRESHOLD = 1.0

    key = jax.random.PRNGKey(0)
    k_cell, k_x = jax.random.split(key)

    cell = ALIFCell(INPUT_SIZE, HIDDEN, threshold=THRESHOLD, key=k_cell)
    # scale inputs so a healthy fraction of neurons actually cross the spike threshold
    x_seq = 3.0 * jax.random.normal(k_x, (T, B, INPUT_SIZE), jnp.float32)

    hx0 = jnp.zeros((B, HIDDEN), jnp.float32)
    cx0 = jnp.zeros((B, HIDDEN), jnp.float32)

    # ---- 1) single ALIFCell.forward step (the literal module forward) -------
    hy, (hy_s, cy_s, cb_s) = cell.forward(x_seq[0], (hx0, cx0))
    jax.block_until_ready(hy)
    hy_r, (_, cy_r, cb_r) = alif_step_ref(cell.params, THRESHOLD, x_seq[0], (hx0, cx0))
    assert hy.shape == (B, HIDDEN)
    assert jnp.array_equal(hy, hy_r), "spike mismatch (single step)"
    assert jnp.allclose(cy_s, cy_r, rtol=1e-4, atol=1e-4)
    assert jnp.allclose(cb_s, cb_r, rtol=1e-4, atol=1e-4)

    # ---- 2) optimized recurrent application over the sequence ---------------
    #     two "parallel" batch tiles of 16, time chunks of 16 (T padded 40->48, tail masked),
    #     bf16 spike-train output (exact for 0/1 spikes).
    hy_seq, (hT, cT, bT) = alif_sequence_pallas(
        cell.params, x_seq, (hx0, cx0), threshold=THRESHOLD,
        time_chunk=16, batch_block=16, spike_dtype=jnp.bfloat16)
    jax.block_until_ready(hy_seq)

    def scan_step(st, x_t):
        out, new_st = alif_step_ref(cell.params, THRESHOLD, x_t, st)
        return new_st, out

    (hT_r, cT_r, bT_r), hy_seq_r = lax.scan(
        scan_step, (hx0, cx0, jnp.ones_like(hx0)), x_seq)

    assert hy_seq.shape == (T, B, HIDDEN)
    assert hy_seq.dtype == jnp.bfloat16
    assert jnp.array_equal(hy_seq.astype(jnp.float32), hy_seq_r), "spike train mismatch (sequence)"
    assert jnp.array_equal(hT, hT_r)
    assert jnp.allclose(cT, cT_r, rtol=1e-4, atol=1e-4)
    assert jnp.allclose(bT, bT_r, rtol=1e-4, atol=1e-4)

    print("KERNEL_OK")
</pallas_src>

<mosaic_0001>
module attributes {stable_mosaic.version = 11 : i64} {
  func.func @_alif_step_kernel(%arg0: memref<32x160xf32, #tpu.memory_space<vmem>>, %arg1: memref<32x128xf32, #tpu.memory_space<vmem>>, %arg2: memref<32x128xf32, #tpu.memory_space<vmem>>, %arg3: memref<160x128xf32, #tpu.memory_space<vmem>>, %arg4: memref<1x128xf32, #tpu.memory_space<vmem>>, %arg5: memref<1x128xf32, #tpu.memory_space<vmem>>, %arg6: memref<1x128xf32, #tpu.memory_space<vmem>>, %arg7: memref<32x128xf32, #tpu.memory_space<vmem>>, %arg8: memref<32x128xf32, #tpu.memory_space<vmem>>, %arg9: memref<32x128xf32, #tpu.memory_space<vmem>>) attributes {dimension_semantics = [], scalar_prefetch = 0 : i64, scratch_operands = 0 : i64, tpu.core_type = #tpu.core_type<tc>} {
    %c0 = arith.constant 0 : index
    %c0_0 = arith.constant 0 : index
    %0 = vector.load %arg0[%c0, %c0_0] : memref<32x160xf32, #tpu.memory_space<vmem>>, vector<32x160xf32>
    %c0_1 = arith.constant 0 : index
    %c0_2 = arith.constant 0 : index
    %1 = vector.load %arg3[%c0_1, %c0_2] : memref<160x128xf32, #tpu.memory_space<vmem>>, vector<160x128xf32>
    %cst = arith.constant dense<0.000000e+00> : vector<32x128xf32>
    %2 = tpu.matmul %0, %1, %cst {dimension_numbers = #tpu.dot_dimension_numbers<[1], [0], [0], [1], [0, 0, 1, 1], [], []>} : vector<32x160xf32>, vector<160x128xf32>, vector<32x128xf32> -> vector<32x128xf32>
    %c0_3 = arith.constant 0 : index
    %c0_4 = arith.constant 0 : index
    %3 = vector.load %arg4[%c0_3, %c0_4] : memref<1x128xf32, #tpu.memory_space<vmem>>, vector<1x128xf32>
    %4 = vector.broadcast %3 : vector<1x128xf32> to vector<32x128xf32>
    %5 = arith.addf %2, %4 : vector<32x128xf32>
    %c0_5 = arith.constant 0 : index
    %c0_6 = arith.constant 0 : index
    %6 = vector.load %arg5[%c0_5, %c0_6] : memref<1x128xf32, #tpu.memory_space<vmem>>, vector<1x128xf32>
    %c0_7 = arith.constant 0 : index
    %c0_8 = arith.constant 0 : index
    %7 = vector.load %arg6[%c0_7, %c0_8] : memref<1x128xf32, #tpu.memory_space<vmem>>, vector<1x128xf32>
    %c0_9 = arith.constant 0 : index
    %c0_10 = arith.constant 0 : index
    %8 = vector.load %arg1[%c0_9, %c0_10] : memref<32x128xf32, #tpu.memory_space<vmem>>, vector<32x128xf32>
    %9 = vector.broadcast %6 : vector<1x128xf32> to vector<32x128xf32>
    %10 = arith.mulf %9, %8 : vector<32x128xf32>
    %cst_11 = arith.constant 1.000000e+00 : f32
    %11 = vector.broadcast %cst_11 : f32 to vector<1x128xf32>
    %12 = arith.subf %11, %6 : vector<1x128xf32>
    %13 = vector.broadcast %12 : vector<1x128xf32> to vector<32x128xf32>
    %14 = arith.mulf %13, %5 : vector<32x128xf32>
    %15 = arith.addf %10, %14 : vector<32x128xf32>
    %cst_12 = arith.constant 1.000000e+00 : f32
    %16 = vector.broadcast %cst_12 : f32 to vector<32x128xf32>
    %17 = arith.cmpf oge, %15, %16 : vector<32x128xf32>
    %18 = arith.extui %17 : vector<32x128xi1> to vector<32x128xi32>
    %19 = arith.sitofp %18 : vector<32x128xi32> to vector<32x128xf32>
    %c0_13 = arith.constant 0 : index
    %c0_14 = arith.constant 0 : index
    %20 = vector.load %arg2[%c0_13, %c0_14] : memref<32x128xf32, #tpu.memory_space<vmem>>, vector<32x128xf32>
    %21 = vector.broadcast %7 : vector<1x128xf32> to vector<32x128xf32>
    %22 = arith.mulf %21, %20 : vector<32x128xf32>
    %cst_15 = arith.constant 1.000000e+00 : f32
    %23 = vector.broadcast %cst_15 : f32 to vector<1x128xf32>
    %24 = arith.subf %23, %7 : vector<1x128xf32>
    %25 = vector.broadcast %24 : vector<1x128xf32> to vector<32x128xf32>
    %26 = arith.mulf %25, %19 : vector<32x128xf32>
    %27 = arith.addf %22, %26 : vector<32x128xf32>
    %28 = arith.mulf %19, %27 : vector<32x128xf32>
    %29 = arith.subf %15, %28 : vector<32x128xf32>
    %c0_16 = arith.constant 0 : index
    %c0_17 = arith.constant 0 : index
    %30 = vector.load %arg7[%c0_16, %c0_17] : memref<32x128xf32, #tpu.memory_space<vmem>>, vector<32x128xf32>
    tpu.vector_store %arg7[%c0_16, %c0_17], %19 {strides = array<i32>} : memref<32x128xf32, #tpu.memory_space<vmem>>, vector<32x128xf32>,
    %c0_18 = arith.constant 0 : index
    %c0_19 = arith.constant 0 : index
    %31 = vector.load %arg8[%c0_18, %c0_19] : memref<32x128xf32, #tpu.memory_space<vmem>>, vector<32x128xf32>
    tpu.vector_store %arg8[%c0_18, %c0_19], %29 {strides = array<i32>} : memref<32x128xf32, #tpu.memory_space<vmem>>, vector<32x128xf32>,
    %c0_20 = arith.constant 0 : index
    %c0_21 = arith.constant 0 : index
    %32 = vector.load %arg9[%c0_20, %c0_21] : memref<32x128xf32, #tpu.memory_space<vmem>>, vector<32x128xf32>
    tpu.vector_store %arg9[%c0_20, %c0_21], %27 {strides = array<i32>} : memref<32x128xf32, #tpu.memory_space<vmem>>, vector<32x128xf32>,
    return
  }
}

</mosaic_0001>

<llo_original>
// kernel: tpu_custom_call.1
$region0: #{tpu_custom_call.1}
  #allocation0 [shape = 'u32[]', space=smem, size = 0x4, offset = 0x4, fixed_abs, tag = 'smem constant byte address 0x4 - core index']
  #allocation1 [shape = 'u32[72,128]{1,0:T(1,128)}', space=vmem, size = 0x9000, scoped, tag = 'internal scratch']
  %s0 = inlined_call_operand.hbm [shape: f32[32,160], index: 0, kind: input, shape index: {}]
  %s1 = inlined_call_operand.hbm [shape: f32[32,128], index: 1, kind: input, shape index: {}]
  %s2 = inlined_call_operand.hbm [shape: f32[32,128], index: 2, kind: input, shape index: {}]
  %s3 = inlined_call_operand.hbm [shape: f32[160,128], index: 3, kind: input, shape index: {}]
  %s4 = inlined_call_operand.vmem [shape: f32[1,128], index: 4, kind: input, shape index: {}]
  %s5 = inlined_call_operand.vmem [shape: f32[1,128], index: 5, kind: input, shape index: {}]
  %s6 = inlined_call_operand.vmem [shape: f32[1,128], index: 6, kind: input, shape index: {}]
  %s7 = inlined_call_operand.hbm [shape: f32[32,128], index: 7, kind: output, shape index: {0}]
  %s8 = inlined_call_operand.hbm [shape: f32[32,128], index: 8, kind: output, shape index: {1}]
  %s9 = inlined_call_operand.hbm [shape: f32[32,128], index: 9, kind: output, shape index: {2}]
  %10 = xla_tuple %s7, %s8, %s9
  %s11 = sld [smem:[#allocation0]]
  $region70: #{tpu_custom_call.1} parent=0
    _
  %s13 = ssub.s32 1, %s11
  %s14 = scalar_select 0, %s13, %s11
  $region1: #{tpu_custom_call.1} parent=0
    #allocation2 [shape = 'u8[32768]{0}', space=vmem, size = 0x8000, scoped, tag = 'input window, operand 0, single buffered']
    #allocation3 [shape = 's32[1]{0}', space=sflag, size = 0x4, scoped, tag = 'scoped memory for tpu_custom_call.1']
    #allocation4 [shape = 's32[1]{0}', space=sflag, size = 0x4, scoped, tag = 'scoped memory for tpu_custom_call.1']
    #allocation5 [shape = 'u8[16384]{0}', space=vmem, size = 0x4000, scoped, tag = 'input window, operand 1, single buffered']
    #allocation6 [shape = 's32[1]{0}', space=sflag, size = 0x4, scoped, tag = 'scoped memory for tpu_custom_call.1']
    #allocation7 [shape = 'u8[16384]{0}', space=vmem, size = 0x4000, scoped, tag = 'input window, operand 2, single buffered']
    #allocation8 [shape = 'u8[81920]{0}', space=vmem, size = 0x14000, scoped, tag = 'input window, operand 3, single buffered']
    #allocation9 [shape = 's32[1]{0}', space=sflag, size = 0x4, scoped, tag = 'scoped memory for tpu_custom_call.1']
    #allocation10 [shape = 'u8[16384]{0}', space=vmem, size = 0x4000, scoped, tag = 'output window, operand 0, single buffered']
    #allocation11 [shape = 'u8[16384]{0}', space=vmem, size = 0x4000, scoped, tag = 'output window, operand 1, single buffered']
    #allocation12 [shape = 's32[1]{0}', space=sflag, size = 0x4, scoped, tag = 'scoped memory for tpu_custom_call.1']
    #allocation13 [shape = 'u8[16384]{0}', space=vmem, size = 0x4000, scoped, tag = 'output window, operand 2, single buffered']
    %15 = vsyncpa [#allocation3], 0
    %16 = vsyncpa [#allocation6], 0
    %17 = vsyncpa [#allocation9], 0
    %18 = vsyncpa [#allocation4], 0
    %19 = vsyncpa [#allocation12], 0
    // Predicated region
    $region2: #{tpu_custom_call.1} parent=1 // pred_check
      _
    $region3: #{tpu_custom_call.1} parent=1 // pred_check_branch
      %21 = sbr.rel (0) target = $region5
    $region4: #{tpu_custom_call.1} parent=1 // pred_region
      %23 = vsyncadd [#allocation3], 0
      %s24 = sshll.u32 %s0, 4
      %s25 = int_to_ptr.hbm [resolvable:$true] %s24
      %s26 = sshll.u32 [#allocation2], 4
      %s27 = int_to_ptr.vmem [resolvable:$true] %s26
      %32 = dma.hbm_to_vmem [thread:$0]  %s25, 1024, %s27, [#allocation3], 256, 256, 16
    $region5: #{tpu_custom_call.1} parent=1 // pred_fallthru
      _
    // Predicated region
    $region6: #{tpu_custom_call.1} parent=1 // pred_check
      _
    $region7: #{tpu_custom_call.1} parent=1 // pred_check_branch
      %34 = sbr.rel (0) target = $region9
    $region8: #{tpu_custom_call.1} parent=1 // pred_region
      %36 = vsyncadd [#allocation6], 0
      %s37 = sshll.u32 %s1, 4
      %s38 = int_to_ptr.hbm [resolvable:$true] %s37
      %s39 = sshll.u32 [#allocation5], 4
      %s40 = int_to_ptr.vmem [resolvable:$true] %s39
      %45 = dma.hbm_to_vmem [thread:$0]  %s38, 512, %s40, [#allocation6], 128, 128, 8
    $region9: #{tpu_custom_call.1} parent=1 // pred_fallthru
      _
    // Predicated region
    $region10: #{tpu_custom_call.1} parent=1 // pred_check
      _
    $region11: #{tpu_custom_call.1} parent=1 // pred_check_branch
      %47 = sbr.rel (0) target = $region13
    $region12: #{tpu_custom_call.1} parent=1 // pred_region
      %49 = vsyncadd [#allocation6], 0
      %s50 = sshll.u32 %s2, 4
      %s51 = int_to_ptr.hbm [resolvable:$true] %s50
      %s52 = sshll.u32 [#allocation7], 4
      %s53 = int_to_ptr.vmem [resolvable:$true] %s52
      %58 = dma.hbm_to_vmem [thread:$0]  %s51, 512, %s53, [#allocation6], 128, 128, 8
    $region13: #{tpu_custom_call.1} parent=1 // pred_fallthru
      _
    // Predicated region
    $region14: #{tpu_custom_call.1} parent=1 // pred_check
      _
    $region15: #{tpu_custom_call.1} parent=1 // pred_check_branch
      %60 = sbr.rel (0) target = $region17
    $region16: #{tpu_custom_call.1} parent=1 // pred_region
      %62 = vsyncadd [#allocation9], 0
      %s63 = sshll.u32 %s3, 4
      %s64 = int_to_ptr.hbm [resolvable:$true] %s63
      %s65 = sshll.u32 [#allocation8], 4
      %s66 = int_to_ptr.vmem [resolvable:$true] %s65
      %71 = dma.hbm_to_vmem [thread:$0]  %s64, 2560, %s66, [#allocation9], 128, 128, 8
    $region17: #{tpu_custom_call.1} parent=1 // pred_fallthru
      _
    // Predicated region
    $region18: #{tpu_custom_call.1} parent=1 // pred_check
      _
    $region19: #{tpu_custom_call.1} parent=1 // pred_check_branch
      %73 = sbr.rel (0) target = $region21
    $region20: #{tpu_custom_call.1} parent=1 // pred_region
      _
    $region21: #{tpu_custom_call.1} parent=1 // pred_fallthru
      _
    // Predicated region
    $region22: #{tpu_custom_call.1} parent=1 // pred_check
      _
    $region23: #{tpu_custom_call.1} parent=1 // pred_check_branch
      %75 = sbr.rel (0) target = $region25
    $region24: #{tpu_custom_call.1} parent=1 // pred_region
      _
    $region25: #{tpu_custom_call.1} parent=1 // pred_fallthru
      _
    // Predicated region
    $region26: #{tpu_custom_call.1} parent=1 // pred_check
      _
    $region27: #{tpu_custom_call.1} parent=1 // pred_check_branch
      %77 = sbr.rel (0) target = $region29
    $region28: #{tpu_custom_call.1} parent=1 // pred_region
      _
    $region29: #{tpu_custom_call.1} parent=1 // pred_fallthru
      _
    // Predicated region
    $region30: #{tpu_custom_call.1} parent=1 // pred_check
      _
    $region31: #{tpu_custom_call.1} parent=1 // pred_check_branch
      %79 = sbr.rel (0) target = $region33
    $region32: #{tpu_custom_call.1} parent=1 // pred_region
      %81 = dma.done [#allocation3], 1024
    $region33: #{tpu_custom_call.1} parent=1 // pred_fallthru
      _
    // Predicated region
    $region34: #{tpu_custom_call.1} parent=1 // pred_check
      _
    $region35: #{tpu_custom_call.1} parent=1 // pred_check_branch
      %83 = sbr.rel (0) target = $region37
    $region36: #{tpu_custom_call.1} parent=1 // pred_region
      %85 = dma.done [#allocation6], 512
    $region37: #{tpu_custom_call.1} parent=1 // pred_fallthru
      _
    // Predicated region
    $region38: #{tpu_custom_call.1} parent=1 // pred_check
      _
    $region39: #{tpu_custom_call.1} parent=1 // pred_check_branch
      %87 = sbr.rel (0) target = $region41
    $region40: #{tpu_custom_call.1} parent=1 // pred_region
      %89 = dma.done [#allocation6], 512
    $region41: #{tpu_custom_call.1} parent=1 // pred_fallthru
      _
    // Predicated region
    $region42: #{tpu_custom_call.1} parent=1 // pred_check
      _
    $region43: #{tpu_custom_call.1} parent=1 // pred_check_branch
      %91 = sbr.rel (0) target = $region45
    $region44: #{tpu_custom_call.1} parent=1 // pred_region
      %93 = dma.done [#allocation9], 2560
    $region45: #{tpu_custom_call.1} parent=1 // pred_fallthru
      _
    %v94 = vld [vmem:[#allocation2] sm:$0xff]
    %v95 = vld [vmem:[#allocation2 + $0x8] sm:$0xff]
    %v96 = vld [vmem:[#allocation2 + $0x10] sm:$0xff]
    %v97 = vld [vmem:[#allocation2 + $0x18] sm:$0xff]
    %v98 = vld [vmem:[#allocation2 + $0x20] sm:$0xff]
    %v99 = vld [vmem:[#allocation2 + $0x28] sm:$0xff]
    %v100 = vld [vmem:[#allocation2 + $0x30] sm:$0xff]
    %v101 = vld [vmem:[#allocation2 + $0x38] sm:$0xff]
    %v102 = vld [vmem:[#allocation8] sm:$0xff]
    %v103 = vld [vmem:[#allocation8 + $0x8] sm:$0xff]
    %v104 = vld [vmem:[#allocation8 + $0x10] sm:$0xff]
    %v105 = vld [vmem:[#allocation8 + $0x18] sm:$0xff]
    %v106 = vld [vmem:[#allocation8 + $0x20] sm:$0xff]
    %v107 = vld [vmem:[#allocation8 + $0x28] sm:$0xff]
    %v108 = vld [vmem:[#allocation8 + $0x30] sm:$0xff]
    %v109 = vld [vmem:[#allocation8 + $0x38] sm:$0xff]
    %v110 = vld [vmem:[#allocation8 + $0x40] sm:$0xff]
    %v111 = vld [vmem:[#allocation8 + $0x48] sm:$0xff]
    %v112 = vld [vmem:[#allocation8 + $0x50] sm:$0xff]
    %v113 = vld [vmem:[#allocation8 + $0x58] sm:$0xff]
    %v114 = vld [vmem:[#allocation8 + $0x60] sm:$0xff]
    %v115 = vld [vmem:[#allocation8 + $0x68] sm:$0xff]
    %v116 = vld [vmem:[#allocation8 + $0x70] sm:$0xff]
    %v117 = vld [vmem:[#allocation8 + $0x78] sm:$0xff]
    %v118 = vld [vmem:[#allocation8 + $0x80] sm:$0xff]
    %v119 = vld [vmem:[#allocation8 + $0x88] sm:$0xff]
    %v120 = vld [vmem:[#allocation8 + $0x90] sm:$0xff]
    %v121 = vld [vmem:[#allocation8 + $0x98] sm:$0xff]
    %v122 = vld [vmem:[%s4] sm:$0x1]
    %v124 = vperm.slane %v122, 0
    %vm126 = vcmask 261120
    %v128 = vsel %vm126, %v95, 0
    %v131 = vsel %vm126, %v97, 0
    %v134 = vsel %vm126, %v99, 0
    %v137 = vsel %vm126, %v101, 0
    %139 = vmatpush.msra.mxu0 %v117
    %140 = vmatpush.msra.mxu0 %v116
    %141 = vmatpush.msra.mxu0 %v115
    %142 = vmatpush.msra.mxu0 %v114
    %143 = vmatpush.msra.mxu0 %v113
    %144 = vmatpush.msra.mxu0 %v112
    %145 = vmatpush.msra.mxu0 %v111
    %146 = vmatpush.msra.mxu0 %v110
    %147 = vmatpush.msra.mxu0 %v109
    %148 = vmatpush.msra.mxu0 %v108
    %149 = vmatpush.msra.mxu0 %v107
    %150 = vmatpush.msra.mxu0 %v106
    %151 = vmatpush.msra.mxu0 %v105
    %152 = vmatpush.msra.mxu0 %v104
    %153 = vmatpush.msra.mxu0 %v103
    %154 = vmatpush.msra.mxu0 %v102
    %155 = vmatmul.f32.gmra.mxu0 %v94
    %v156 = vpop.f32.mrf.mxu0
    %v157 = vadd.f32 %v124, %v156
    %158 = vmatmul.f32.gmra.mxu0 %v96
    %v159 = vpop.f32.mrf.mxu0
    %v160 = vadd.f32 %v124, %v159
    %161 = vmatmul.f32.gmra.mxu0 %v98
    %v162 = vpop.f32.mrf.mxu0
    %v163 = vadd.f32 %v124, %v162
    %164 = vmatmul.f32.gmra.mxu0 %v100
    %v165 = vpop.f32.mrf.mxu0
    %v166 = vadd.f32 %v124, %v165
    %167 = vdwg.mxu0
    %168 = vmatpush.msra.mxu0 0.0
    %169 = vmatpush.msra.mxu0 0.0
    %170 = vmatpush.msra.mxu0 0.0
    %171 = vmatpush.msra.mxu0 0.0
    %172 = vmatpush.msra.mxu0 0.0
    %173 = vmatpush.msra.mxu0 0.0
    %174 = vmatpush.msra.mxu0 0.0
    %175 = vmatpush.msra.mxu0 0.0
    %176 = vmatpush.msra.mxu0 0.0
    %177 = vmatpush.msra.mxu0 0.0
    %178 = vmatpush.msra.mxu0 0.0
    %179 = vmatpush.msra.mxu0 0.0
    %180 = vmatpush.msra.mxu0 %v121
    %181 = vmatpush.msra.mxu0 %v120
    %182 = vmatpush.msra.mxu0 %v119
    %183 = vmatpush.msra.mxu0 %v118
    %184 = vmatmul.f32.gmra.mxu0 %v128
    %v185 = vpop.f32.mrf.mxu0
    %v186 = vadd.f32 %v157, %v185
    %187 = vmatmul.f32.gmra.mxu0 %v131
    %v188 = vpop.f32.mrf.mxu0
    %v189 = vadd.f32 %v160, %v188
    %190 = vmatmul.f32.gmra.mxu0 %v134
    %v191 = vpop.f32.mrf.mxu0
    %v192 = vadd.f32 %v163, %v191
    %193 = vmatmul.f32.gmra.mxu0 %v137
    %v194 = vpop.f32.mrf.mxu0
    %v195 = vadd.f32 %v166, %v194
    %196 = vdwg.mxu0
    %v197 = vld [vmem:[%s5] sm:$0x1]
    %v198 = vld [vmem:[%s6] sm:$0x1]
    %v199 = vld [vmem:[#allocation5] sm:$0xff]
    %v200 = vld [vmem:[#allocation5 + $0x8] sm:$0xff]
    %v201 = vld [vmem:[#allocation5 + $0x10] sm:$0xff]
    %v202 = vld [vmem:[#allocation5 + $0x18] sm:$0xff]
    %v204 = vperm.slane %v197, 0
    %v206 = vmul.f32 %v204, %v199
    %v207 = vmul.f32 %v204, %v200
    %v208 = vmul.f32 %v204, %v201
    %v209 = vmul.f32 %v204, %v202
    %v210 = vsub.f32 1.0, %v197
    %v212 = vperm.slane %v210, 0
    %v214 = vmul.f32 %v212, %v186
    %v215 = vmul.f32 %v212, %v189
    %v216 = vmul.f32 %v212, %v192
    %v217 = vmul.f32 %v212, %v195
    %v218 = vadd.f32 %v206, %v214
    %v219 = vadd.f32 %v207, %v215
    %v220 = vadd.f32 %v208, %v216
    %v221 = vadd.f32 %v209, %v217
    %vm222 = vcmp.ge.f32.partialorder %v218, 1.0
    %vm223 = vcmp.ge.f32.partialorder %v219, 1.0
    %vm224 = vcmp.ge.f32.partialorder %v220, 1.0
    %vm225 = vcmp.ge.f32.partialorder %v221, 1.0
    %v226 = vsel %vm222, 1, 0
    %v227 = vsel %vm223, 1, 0
    %v228 = vsel %vm224, 1, 0
    %v229 = vsel %vm225, 1, 0
    %v230 = vcvt.s32.f32 %v226
    %v231 = vcvt.s32.f32 %v227
    %v232 = vcvt.s32.f32 %v228
    %v233 = vcvt.s32.f32 %v229
    %v234 = vld [vmem:[#allocation7] sm:$0xff]
    %v235 = vld [vmem:[#allocation7 + $0x8] sm:$0xff]
    %v236 = vld [vmem:[#allocation7 + $0x10] sm:$0xff]
    %v237 = vld [vmem:[#allocation7 + $0x18] sm:$0xff]
    %v239 = vperm.slane %v198, 0
    %v241 = vmul.f32 %v239, %v234
    %v242 = vmul.f32 %v239, %v235
    %v243 = vmul.f32 %v239, %v236
    %v244 = vmul.f32 %v239, %v237
    %v245 = vsub.f32 1.0, %v198
    %v247 = vperm.slane %v245, 0
    %v249 = vmul.f32 %v247, %v230
    %v250 = vmul.f32 %v247, %v231
    %v251 = vmul.f32 %v247, %v232
    %v252 = vmul.f32 %v247, %v233
    %v253 = vadd.f32 %v241, %v249
    %v254 = vadd.f32 %v242, %v250
    %v255 = vadd.f32 %v243, %v251
    %v256 = vadd.f32 %v244, %v252
    %v257 = vmul.f32 %v230, %v253
    %v258 = vmul.f32 %v231, %v254
    %v259 = vmul.f32 %v232, %v255
    %v260 = vmul.f32 %v233, %v256
    %v261 = vsub.f32 %v218, %v257
    %v262 = vsub.f32 %v219, %v258
    %v263 = vsub.f32 %v220, %v259
    %v264 = vsub.f32 %v221, %v260
    %265 = vst [vmem:[#allocation10] sm:$0xff] %v230
    %266 = vst [vmem:[#allocation10 + $0x8] sm:$0xff] %v231
    %267 = vst [vmem:[#allocation10 + $0x10] sm:$0xff] %v232
    %268 = vst [vmem:[#allocation10 + $0x18] sm:$0xff] %v233
    %269 = vst [vmem:[#allocation11] sm:$0xff] %v261
    %270 = vst [vmem:[#allocation11 + $0x8] sm:$0xff] %v262
    %271 = vst [vmem:[#allocation11 + $0x10] sm:$0xff] %v263
    %272 = vst [vmem:[#allocation11 + $0x18] sm:$0xff] %v264
    %273 = vst [vmem:[#allocation13] sm:$0xff] %v253
    %274 = vst [vmem:[#allocation13 + $0x8] sm:$0xff] %v254
    %275 = vst [vmem:[#allocation13 + $0x10] sm:$0xff] %v255
    %276 = vst [vmem:[#allocation13 + $0x18] sm:$0xff] %v256
    // Predicated region
    $region46: #{tpu_custom_call.1} parent=1 // pred_check
      _
    $region47: #{tpu_custom_call.1} parent=1 // pred_check_branch
      %278 = sbr.rel (0) target = $region49
    $region48: #{tpu_custom_call.1} parent=1 // pred_region
      %280 = vsyncadd [#allocation4], 0
      %s281 = sshll.u32 [#allocation10], 4
      %s282 = int_to_ptr.vmem [resolvable:$true] %s281
      %s283 = sshll.u32 %s7, 4
      %s284 = int_to_ptr.hbm [resolvable:$true] %s283
      %289 = dma.vmem_to_hbm [thread:$0]  %s282, 512, %s284, [#allocation4], 128, 128, 8
    $region49: #{tpu_custom_call.1} parent=1 // pred_fallthru
      _
    // Predicated region
    $region50: #{tpu_custom_call.1} parent=1 // pred_check
      _
    $region51: #{tpu_custom_call.1} parent=1 // pred_check_branch
      %291 = sbr.rel (0) target = $region53
    $region52: #{tpu_custom_call.1} parent=1 // pred_region
      %293 = vsyncadd [#allocation12], 0
      %s294 = sshll.u32 [#allocation11], 4
      %s295 = int_to_ptr.vmem [resolvable:$true] %s294
      %s296 = sshll.u32 %s8, 4
      %s297 = int_to_ptr.hbm [resolvable:$true] %s296
      %302 = dma.vmem_to_hbm [thread:$0]  %s295, 512, %s297, [#allocation12], 128, 128, 8
    $region53: #{tpu_custom_call.1} parent=1 // pred_fallthru
      _
    // Predicated region
    $region54: #{tpu_custom_call.1} parent=1 // pred_check
      _
    $region55: #{tpu_custom_call.1} parent=1 // pred_check_branch
      %304 = sbr.rel (0) target = $region57
    $region56: #{tpu_custom_call.1} parent=1 // pred_region
      %306 = vsyncadd [#allocation12], 0
      %s307 = sshll.u32 [#allocation13], 4
      %s308 = int_to_ptr.vmem [resolvable:$true] %s307
      %s309 = sshll.u32 %s9, 4
      %s310 = int_to_ptr.hbm [resolvable:$true] %s309
      %315 = dma.vmem_to_hbm [thread:$0]  %s308, 512, %s310, [#allocation12], 128, 128, 8
    $region57: #{tpu_custom_call.1} parent=1 // pred_fallthru
      _
    // Predicated region
    $region58: #{tpu_custom_call.1} parent=1 // pred_check
      _
    $region59: #{tpu_custom_call.1} parent=1 // pred_check_branch
      %317 = sbr.rel (0) target = $region61
    $region60: #{tpu_custom_call.1} parent=1 // pred_region
      %319 = dma.done [#allocation4], 512
    $region61: #{tpu_custom_call.1} parent=1 // pred_fallthru
      _
    // Predicated region
    $region62: #{tpu_custom_call.1} parent=1 // pred_check
      _
    $region63: #{tpu_custom_call.1} parent=1 // pred_check_branch
      %321 = sbr.rel (0) target = $region65
    $region64: #{tpu_custom_call.1} parent=1 // pred_region
      %323 = dma.done [#allocation12], 512
    $region65: #{tpu_custom_call.1} parent=1 // pred_fallthru
      _
    // Predicated region
    $region66: #{tpu_custom_call.1} parent=1 // pred_check
      _
    $region67: #{tpu_custom_call.1} parent=1 // pred_check_branch
      %325 = sbr.rel (0) target = $region69
    $region68: #{tpu_custom_call.1} parent=1 // pred_region
      %327 = dma.done [#allocation12], 512
    $region69: #{tpu_custom_call.1} parent=1 // pred_fallthru
      _
    %328 = vsyncpa [#allocation3], 1
    %329 = vsyncpa [#allocation6], 1
    %330 = vsyncpa [#allocation9], 1
    %331 = vsyncpa [#allocation4], 1
    %332 = vsyncpa [#allocation12], 1

</llo_original>
